<compile_context>
chip_gen: v5e
topology: v5e:2x2
jax: 0.10.0
libtpu: 0.0.40
codegen_flags: <defaults>
</compile_context>

<pallas_src>
import numpy as np
import jax
import jax.numpy as jnp
from jax.experimental import pallas as pl
from jax.experimental.pallas import tpu as pltpu


# ----------------------------------------------------------------------------
# Variant 1: single whole-array HBM->HBM DMA (no grid, no VMEM round-trip).
# ----------------------------------------------------------------------------
def _hbm_copy_kernel(x_hbm, o_hbm, sem):
    cp = pltpu.make_async_copy(x_hbm, o_hbm, sem)
    cp.start()
    cp.wait()


def _flatten_copy_dma(x_flat: jax.Array) -> jax.Array:
    n, f = x_flat.shape
    itemsize = jnp.dtype(x_flat.dtype).itemsize
    return pl.pallas_call(
        _hbm_copy_kernel,
        out_shape=jax.ShapeDtypeStruct((n, f), x_flat.dtype),
        in_specs=[pl.BlockSpec(memory_space=pl.ANY)],
        out_specs=pl.BlockSpec(memory_space=pl.ANY),
        scratch_shapes=[pltpu.SemaphoreType.DMA],
        cost_estimate=pl.CostEstimate(
            flops=0, transcendentals=0, bytes_accessed=2 * n * f * itemsize
        ),
    )(x_flat)


# ----------------------------------------------------------------------------
# Variant 2: tiled, pipelined streaming copy with masked ragged tails.
# ----------------------------------------------------------------------------
def _flatten_copy_block_kernel(x_ref, o_ref):
    # Identity copy of one (tile_n, tile_f) block of the flattened tensor.
    o_ref[...] = x_ref[...]


def _flatten_copy_tiled(x_flat: jax.Array, *, target_block_bytes: int = 4 << 20) -> jax.Array:
    n, f = x_flat.shape
    itemsize = jnp.dtype(x_flat.dtype).itemsize
    sublane = max(8, 32 // itemsize)  # 8 for f32, 16 for bf16, 32 for int8

    # Feature tile: prefer the full lane-dense width (one contiguous HBM range
    # per block); otherwise the largest 128-multiple under the byte budget.
    # Tiles never exceed the array extent; cdiv + masked tail handles ragged f.
    if f <= 128:
        tile_f = f  # full extent satisfies the (8,128) rule
    else:
        cap_f = max(128, (target_block_bytes // (sublane * itemsize)) // 128 * 128)
        tile_f = min((f // 128) * 128, cap_f)

    # Batch tile: multiple of the sublane packing (or full extent for tiny
    # batches), sized so one block stays under the byte budget.
    if n <= sublane:
        tile_n = n
    else:
        cap_n = max(
            sublane, (target_block_bytes // (tile_f * itemsize)) // sublane * sublane
        )
        tile_n = min((n // sublane) * sublane, cap_n)

    grid = (pl.cdiv(n, tile_n), pl.cdiv(f, tile_f))

    return pl.pallas_call(
        _flatten_copy_block_kernel,
        out_shape=jax.ShapeDtypeStruct((n, f), x_flat.dtype),
        grid=grid,
        in_specs=[pl.BlockSpec((tile_n, tile_f), lambda i, j: (i, j))],
        out_specs=pl.BlockSpec((tile_n, tile_f), lambda i, j: (i, j)),
        cost_estimate=pl.CostEstimate(
            flops=0, transcendentals=0, bytes_accessed=2 * n * f * itemsize
        ),
        compiler_params=pltpu.CompilerParams(
            dimension_semantics=("parallel", "parallel"),
            # 2 in-bufs + 2 out-bufs at <=4 MiB each stays ~16 MiB; raise the
            # scoped limit explicitly so v5e's 16 MiB default never bites while
            # staying well inside v7x's 64 MiB physical VMEM.
            vmem_limit_bytes=48 << 20,
        ),
    )(x_flat)


# ----------------------------------------------------------------------------
# Public wrapper — same semantics as My_Reshape.forward.
# ----------------------------------------------------------------------------
def my_reshape_forward(x: jax.Array, *, materialize: bool = False,
                       use_tiled: bool = False) -> jax.Array:
    """Flatten all dims except dim 0 (== torch.flatten(x, 1)).

    materialize=False (default): metadata-only reshape, no kernel, no HBM traffic.
    materialize=True: explicit Pallas copy of the flattened tensor
      (use_tiled=False -> single HBM->HBM DMA; True -> tiled streaming copy).
    """
    n = x.shape[0]
    f = int(np.prod(x.shape[1:]))
    x_flat = x.reshape(n, f)  # row-major, identical ordering to torch.flatten(x, 1)
    if not materialize:
        return x_flat
    if use_tiled:
        return _flatten_copy_tiled(x_flat)
    return _flatten_copy_dma(x_flat)


if __name__ == "__main__":
    key = jax.random.PRNGKey(0)
    # Small NCHW input consistent with a conv feature map.
    x = jax.random.normal(key, (2, 4, 16, 16), dtype=jnp.float32)
    y_ref = jnp.reshape(x, (x.shape[0], -1))

    # Fast path (metadata-only reshape, the recommended default).
    y_fast = my_reshape_forward(x)
    # Explicit materialization via a single HBM->HBM DMA.
    y_dma = my_reshape_forward(x, materialize=True)
    # Tiled streaming copy (nicely shaped: one contiguous (2, 1024) block).
    y_tiled = my_reshape_forward(x, materialize=True, use_tiled=True)

    # Ragged shape to exercise the cdiv grid + masked tail path (no pad/slice).
    x_ragged = jax.random.normal(jax.random.PRNGKey(0), (3, 5, 7, 9), dtype=jnp.float32)
    y_ragged = my_reshape_forward(x_ragged, materialize=True, use_tiled=True)
    y_ragged_ref = jnp.reshape(x_ragged, (x_ragged.shape[0], -1))

    jax.block_until_ready((y_fast, y_dma, y_tiled, y_ragged))

    for y in (y_fast, y_dma, y_tiled):
        assert y.shape == (2, 4 * 16 * 16), y.shape
        assert y.dtype == x.dtype
        np.testing.assert_array_equal(np.asarray(y), np.asarray(y_ref))
    assert y_ragged.shape == (3, 5 * 7 * 9), y_ragged.shape
    np.testing.assert_array_equal(np.asarray(y_ragged), np.asarray(y_ragged_ref))

    print("KERNEL_OK")
</pallas_src>

<mosaic_0001>
module attributes {stable_mosaic.version = 11 : i64} {
  func.func @_hbm_copy_kernel(%arg0: memref<2x1024xf32, #tpu.memory_space<any>>, %arg1: memref<2x1024xf32, #tpu.memory_space<any>>, %arg2: memref<!tpu.dma_semaphore, #tpu.memory_space<semaphore_mem>>) attributes {dimension_semantics = [], scalar_prefetch = 0 : i64, scratch_operands = 1 : i64, tpu.core_type = #tpu.core_type<tc>} {
    tpu.enqueue_dma source(%arg0 : memref<2x1024xf32, #tpu.memory_space<any>>) target(%arg1 : memref<2x1024xf32, #tpu.memory_space<any>>) target_semaphore(%arg2 : memref<!tpu.dma_semaphore, #tpu.memory_space<semaphore_mem>>)
    tpu.wait_dma2 semaphore(%arg2 : memref<!tpu.dma_semaphore, #tpu.memory_space<semaphore_mem>>) src(%arg0 : memref<2x1024xf32, #tpu.memory_space<any>>) dst(%arg1 : memref<2x1024xf32, #tpu.memory_space<any>>)
    return
  }
}

</mosaic_0001>

<llo_original>
// kernel: tpu_custom_call.1
$region0: #{tpu_custom_call.1}
  #allocation0 [shape = 'u32[]', space=smem, size = 0x4, offset = 0x4, fixed_abs, tag = 'smem constant byte address 0x4 - core index']
  #allocation1 [shape = 'u32[72,128]{1,0:T(1,128)}', space=vmem, size = 0x9000, scoped, tag = 'internal scratch']
  #allocation2 [shape = 's32[1]{0}', space=sflag, size = 0x4, scoped, tag = 'scratch operand']
  #allocation3 [shape = 's32[]', space=sflag, size = 0x4, offset = 0, fixed_abs, tag = 'sflag constant byte address 0x0 - dummy sync flag']
  #allocation4 [shape = 'u32[0]{0}', space=smem, size = 0, offset = 0, fixed_abs, tag = 'smem constant byte address 0x0 - null']
  %s0 = inlined_call_operand.hbm [shape: f32[2,1024], index: 0, kind: input, shape index: {}]
  %s1 = inlined_call_operand.hbm [shape: f32[2,1024], index: 1, kind: output, shape index: {}]
  %s2 = sld [smem:[#allocation0]]
  $region2: #{tpu_custom_call.1} parent=0
    _
  %s4 = ssub.s32 1, %s2
  %s5 = scalar_select 0, %s4, %s2
  %s7 = sshll.u32 1, 14
  %s8 = sxor.u32 4294967295, %s7
  %s10 = sshll.u32 %s0, 4
  %s11 = int_to_ptr.hbm [resolvable:$true] %s10
  %s12 = sshll.u32 %s1, 4
  %s13 = int_to_ptr.hbm [resolvable:$true] %s12
  %16 = dma.general %s11, 256, %s13, [#allocation2], [#allocation3], [#allocation4], 0, 0
  %s17 = smul.u32 2, 1
  %s18 = smul.u32 %s17, 8
  %s19 = sshll.u32 %s18, 4
  %20 = dma.done [#allocation2], %s19
  %21 = vsyncmov [#allocation2]
  %s22 = vpop.sfrf %21
  %p23 = scmp.eq.s32.totalorder %s22, 0
  %p24 = pneg %p23
  %26 = shalt.err (%p24)

</llo_original>
